<compile_context>
chip_gen: v7x
topology: tpu7x:2x2x1
jax: 0.10.0
libtpu: 0.0.40
codegen_flags: <defaults>
</compile_context>

<pallas_src>
import jax
import jax.numpy as jnp
from jax.experimental import pallas as pl
from jax.experimental.pallas import tpu as pltpu

LANE = 128
SUBLANE = 8


def _round_up(x, m):
    return -(-x // m) * m


def _triu_kernel(x_ref, m_ref, b_ref, o_ref):
    # x_ref: (tile_r, Win) streamed rows; m_ref: (Win, W) resident mixing
    # matrix; b_ref: (1, W) f32 bias; o_ref: (tile_r, W) lane-dense output.
    acc = jnp.dot(x_ref[...], m_ref[...], preferred_element_type=jnp.float32)
    o_ref[...] = (acc + b_ref[...]).astype(o_ref.dtype)


def pack_triu_params(mix_matrix, bias, *, lane_width=LANE):
    """Build the lane-dense mixing matrix / bias once (call at param time).

    If T divides lane_width: pack k = lane_width // T time groups per row and
    return the (k*T, k*T) block-diagonal matrix (fully lane-dense I/O).
    Otherwise: k = 1 and the matrix is (T, W) with W = round_up(T, lane_width);
    the extra output lanes (and bias) are zero and sliced off after the kernel.
    """
    T = mix_matrix.shape[0]
    if T <= lane_width and lane_width % T == 0:
        k = lane_width // T
        m_big = jnp.kron(jnp.eye(k, dtype=mix_matrix.dtype), mix_matrix)
        b_big = jnp.tile(bias, k).reshape(1, k * T)
    else:
        k = 1
        W = _round_up(T, lane_width)
        m_big = jnp.zeros((T, W), dtype=mix_matrix.dtype).at[:, :T].set(mix_matrix)
        b_big = jnp.zeros((1, W), dtype=bias.dtype).at[0, :T].set(bias)
    return m_big, b_big, k, T


def triu_forward(inputs, m_big, b_big, k, *, tile_rows=4096, compute_dtype=None,
                 stream_vmem_budget=16 * 1024 * 1024):
    """inputs: (B, C, T); (m_big, b_big, k) from pack_triu_params."""
    B, C, T = inputs.shape
    Win, W = m_big.shape
    N = B * C
    x2 = inputs.reshape(N, T)

    # Rows of the (packed) 2-D view the kernel streams over.  Pad only up to
    # a multiple of k rows (and a minimum of one sublane group for tiny N);
    # the partial last grid tile is handled by Pallas (OOB writes dropped).
    rows = max(-(-N // k), SUBLANE)
    n_needed = rows * k
    if n_needed != N:
        x2 = jnp.zeros((n_needed, T), dtype=inputs.dtype).at[:N].set(x2)
    x_packed = x2.reshape(rows, Win) if k > 1 else x2   # contiguous reshape

    cdt = inputs.dtype if compute_dtype is None else compute_dtype
    x_packed = x_packed.astype(cdt)
    m_cast = m_big.astype(cdt)
    b_f32 = b_big.astype(jnp.float32)

    # Row-tile size: multiple of 8 sublanes, large enough to amortize the
    # ~0.35us per-step pipeline overhead, small enough that double-buffered
    # in+out tiles stay inside the VMEM budget, and capped so the grid keeps
    # >=4 steps (>=2 per TensorCore on 2-TC chips) when rows allow it.
    in_itemsize = jnp.dtype(cdt).itemsize
    out_itemsize = inputs.dtype.itemsize
    bytes_per_row = Win * in_itemsize + W * out_itemsize
    vmem_rows = max(SUBLANE, stream_vmem_budget // (2 * bytes_per_row))
    occupancy_rows = _round_up(-(-rows // 4), SUBLANE)
    tile_r = min(tile_rows, vmem_rows, occupancy_rows)
    tile_r = max(SUBLANE, (tile_r // SUBLANE) * SUBLANE)

    grid = (pl.cdiv(rows, tile_r),)

    cost = pl.CostEstimate(
        flops=2 * rows * Win * W,
        transcendentals=0,
        bytes_accessed=(rows * Win * in_itemsize + rows * W * out_itemsize
                        + m_cast.size * in_itemsize + b_f32.size * 4),
    )

    out_packed = pl.pallas_call(
        _triu_kernel,
        out_shape=jax.ShapeDtypeStruct((rows, W), inputs.dtype),
        grid=grid,
        in_specs=[
            pl.BlockSpec((tile_r, Win), lambda i: (i, 0)),   # streamed row tiles
            pl.BlockSpec((Win, W), lambda i: (0, 0)),        # resident mix matrix
            pl.BlockSpec((1, W), lambda i: (0, 0)),          # resident bias
        ],
        out_specs=pl.BlockSpec((tile_r, W), lambda i: (i, 0)),
        compiler_params=pltpu.CompilerParams(
            dimension_semantics=("parallel",),
            vmem_limit_bytes=48 * 1024 * 1024,   # safe on v5e/v6e (128 MiB) and v7x (64 MiB)
        ),
        cost_estimate=cost,
    )(x_packed, m_cast, b_f32)

    if k > 1:
        out = out_packed.reshape(n_needed, T)
        if n_needed != N:
            out = out[:N]
    else:
        out = out_packed[:N, :T] if (n_needed != N or W != T) else out_packed
    return out.reshape(B, C, T)


def make_triu_params(time_step, key):
    """Deterministically build the per-step Linear(i+1, 1) weights and fold
    them into an upper-triangular (T, T) mixing matrix + (T,) bias."""
    M = jnp.zeros((time_step, time_step), dtype=jnp.float32)
    bias = jnp.zeros((time_step,), dtype=jnp.float32)
    for i in range(time_step):
        key, kw, kb = jax.random.split(key, 3)
        fan_in = i + 1
        bound = 1.0 / jnp.sqrt(fan_in)   # mimic nn.Linear default init range
        w_i = jax.random.uniform(kw, (fan_in,), jnp.float32, -bound, bound)
        b_i = jax.random.uniform(kb, (), jnp.float32, -bound, bound)
        M = M.at[0:i + 1, i].set(w_i)
        bias = bias.at[i].set(b_i)
    return M, bias


def triu_reference(inputs, mix_matrix, bias):
    # Pure-JAX reference of the same math.
    return jnp.einsum("bct,ts->bcs", inputs, mix_matrix) + bias[None, None, :]


if __name__ == "__main__":
    key = jax.random.PRNGKey(0)
    B, C, T = 2, 4, 8   # time_step = 8 (divides 128 -> packed fast path)

    kx, kp = jax.random.split(key)
    inputs = jax.random.normal(kx, (B, C, T), dtype=jnp.float32)
    M, bias = make_triu_params(T, kp)
    m_big, b_big, k, _ = pack_triu_params(M, bias)

    out = triu_forward(inputs, m_big, b_big, k)
    out = jax.block_until_ready(out)
    ref = triu_reference(inputs, M, bias)
    assert out.shape == (B, C, T)
    assert jnp.allclose(out, ref, atol=1e-5, rtol=1e-5)

    # Exercise the lane-padded fallback path (T does not divide 128).
    T2 = 12
    kx2, kp2 = jax.random.split(kp)
    inputs2 = jax.random.normal(kx2, (B, C, T2), dtype=jnp.float32)
    M2, bias2 = make_triu_params(T2, kp2)
    m_big2, b_big2, k2, _ = pack_triu_params(M2, bias2)
    out2 = jax.block_until_ready(triu_forward(inputs2, m_big2, b_big2, k2))
    ref2 = triu_reference(inputs2, M2, bias2)
    assert jnp.allclose(out2, ref2, atol=1e-5, rtol=1e-5)

    print("KERNEL_OK")
</pallas_src>

<mosaic_0001>
module attributes {stable_mosaic.version = 11 : i64} {
  func.func @_triu_kernel(%arg0: i32, %arg1: memref<8x128xf32, #tpu.memory_space<vmem>>, %arg2: memref<128x128xf32, #tpu.memory_space<vmem>>, %arg3: memref<1x128xf32, #tpu.memory_space<vmem>>, %arg4: memref<8x128xf32, #tpu.memory_space<vmem>>) attributes {dimension_semantics = [#tpu.dimension_semantics<parallel>], iteration_bounds = array<i64: 1>, scalar_prefetch = 0 : i64, scratch_operands = 0 : i64, tpu.core_type = #tpu.core_type<tc>, window_params = [{transform_indices = @transform_0, window_bounds = array<i64: 8, 128>}, {pipeline_mode = #tpu.pipeline_mode<synchronous>, transform_indices = @transform_1, window_bounds = array<i64: 128, 128>}, {pipeline_mode = #tpu.pipeline_mode<synchronous>, transform_indices = @transform_2, window_bounds = array<i64: 1, 128>}, {transform_indices = @transform_3, window_bounds = array<i64: 8, 128>}]} {
    %c0 = arith.constant 0 : index
    %c0_0 = arith.constant 0 : index
    %0 = vector.load %arg1[%c0, %c0_0] : memref<8x128xf32, #tpu.memory_space<vmem>>, vector<8x128xf32>
    %c0_1 = arith.constant 0 : index
    %c0_2 = arith.constant 0 : index
    %1 = vector.load %arg2[%c0_1, %c0_2] : memref<128x128xf32, #tpu.memory_space<vmem>>, vector<128x128xf32>
    %cst = arith.constant dense<0.000000e+00> : vector<8x128xf32>
    %2 = tpu.matmul %0, %1, %cst {dimension_numbers = #tpu.dot_dimension_numbers<[1], [0], [0], [1], [0, 0, 1, 1], [], []>} : vector<8x128xf32>, vector<128x128xf32>, vector<8x128xf32> -> vector<8x128xf32>
    %c0_3 = arith.constant 0 : index
    %c0_4 = arith.constant 0 : index
    %3 = vector.load %arg3[%c0_3, %c0_4] : memref<1x128xf32, #tpu.memory_space<vmem>>, vector<1x128xf32>
    %4 = vector.broadcast %3 : vector<1x128xf32> to vector<8x128xf32>
    %5 = arith.addf %2, %4 : vector<8x128xf32>
    %c0_5 = arith.constant 0 : index
    %c0_6 = arith.constant 0 : index
    %6 = vector.load %arg4[%c0_5, %c0_6] : memref<8x128xf32, #tpu.memory_space<vmem>>, vector<8x128xf32>
    tpu.vector_store %arg4[%c0_5, %c0_6], %5 {strides = array<i32>} : memref<8x128xf32, #tpu.memory_space<vmem>>, vector<8x128xf32>,
    return
  }
  func.func @transform_0(%arg0: i32) -> (i32, i32) {
    %c0_i32 = arith.constant 0 : i32
    %c0_i32_0 = arith.constant 0 : i32
    return %arg0, %c0_i32 : i32, i32
  }
  func.func @transform_1(%arg0: i32) -> (i32, i32) {
    %c0_i32 = arith.constant 0 : i32
    %c0_i32_0 = arith.constant 0 : i32
    %c0_i32_1 = arith.constant 0 : i32
    return %c0_i32, %c0_i32_0 : i32, i32
  }
  func.func @transform_2(%arg0: i32) -> (i32, i32) {
    %c0_i32 = arith.constant 0 : i32
    %c0_i32_0 = arith.constant 0 : i32
    %c0_i32_1 = arith.constant 0 : i32
    return %c0_i32, %c0_i32_0 : i32, i32
  }
  func.func @transform_3(%arg0: i32) -> (i32, i32) {
    %c0_i32 = arith.constant 0 : i32
    %c0_i32_0 = arith.constant 0 : i32
    return %arg0, %c0_i32 : i32, i32
  }
}

</mosaic_0001>

<llo_original>
// kernel: tpu_custom_call.1
$region0: #{tpu_custom_call.1}
  #allocation0 [shape = 'u32[]', space=smem, size = 0x4, offset = 0x4, fixed_abs, tag = 'smem constant byte address 0x4 - core index']
  #allocation1 [shape = 'u32[144,128]{1,0:T(1,128)}', space=vmem, size = 0x12000, scoped, tag = 'internal scratch']
  %s0 = inlined_call_operand.hbm [shape: f32[8,128], index: 0, kind: input, shape index: {}]
  %s1 = inlined_call_operand.hbm [shape: f32[128,128], index: 1, kind: input, shape index: {}]
  %s2 = inlined_call_operand.vmem [shape: f32[1,128], index: 2, kind: input, shape index: {}]
  %s3 = inlined_call_operand.hbm [shape: f32[8,128], index: 3, kind: output, shape index: {}]
  %s4 = sld [smem:[#allocation0]]
  $region30: #{tpu_custom_call.1} parent=0
    _
  %s6 = ssub.s32 1, %s4
  %s7 = scalar_select 0, %s6, %s4
  $region1: #{tpu_custom_call.1} parent=0
    #allocation2 [shape = 'u8[4096]{0}', space=vmem, size = 0x1000, scoped, tag = 'input window, operand 0, single buffered']
    #allocation3 [shape = 's32[1]{0}', space=sflag, size = 0x4, scoped, tag = 'scoped memory for tpu_custom_call.1']
    #allocation4 [shape = 's32[1]{0}', space=sflag, size = 0x4, scoped, tag = 'scoped memory for tpu_custom_call.1']
    #allocation5 [shape = 'u8[65536]{0}', space=vmem, size = 0x10000, scoped, tag = 'input window, operand 1, single buffered']
    #allocation6 [shape = 's32[1]{0}', space=sflag, size = 0x4, scoped, tag = 'scoped memory for tpu_custom_call.1']
    #allocation7 [shape = 'u8[4096]{0}', space=vmem, size = 0x1000, scoped, tag = 'output window, operand 0, single buffered']
    %8 = vsyncpa [#allocation3], 0
    %9 = vsyncpa [#allocation6], 0
    %10 = vsyncpa [#allocation4], 0
    // Predicated region
    $region2: #{tpu_custom_call.1} parent=1 // pred_check
      _
    $region3: #{tpu_custom_call.1} parent=1 // pred_check_branch
      %12 = sbr.rel (0) target = $region5
    $region4: #{tpu_custom_call.1} parent=1 // pred_region
      %s14 = ssub.s32 128, 128
      %15 = vsyncadd [#allocation3], %s14
      %s17 = sshll.u32 [#allocation2], 4
      %s18 = int_to_ptr.vmem [resolvable:$true] %s17
      %20 = dma.hbm_to_vmem [thread:$0]  %s0, 128, %s18, [#allocation3]
    $region5: #{tpu_custom_call.1} parent=1 // pred_fallthru
      _
    // Predicated region
    $region6: #{tpu_custom_call.1} parent=1 // pred_check
      _
    $region7: #{tpu_custom_call.1} parent=1 // pred_check_branch
      %22 = sbr.rel (0) target = $region9
    $region8: #{tpu_custom_call.1} parent=1 // pred_region
      %s24 = ssub.s32 2048, 2048
      %25 = vsyncadd [#allocation6], %s24
      %s26 = sshll.u32 [#allocation5], 4
      %s27 = int_to_ptr.vmem [resolvable:$true] %s26
      %32 = dma.hbm_to_vmem [thread:$0]  %s1, 2048, %s27, [#allocation6], 128, 128, 8
    $region9: #{tpu_custom_call.1} parent=1 // pred_fallthru
      _
    // Predicated region
    $region10: #{tpu_custom_call.1} parent=1 // pred_check
      _
    $region11: #{tpu_custom_call.1} parent=1 // pred_check_branch
      %34 = sbr.rel (0) target = $region13
    $region12: #{tpu_custom_call.1} parent=1 // pred_region
      _
    $region13: #{tpu_custom_call.1} parent=1 // pred_fallthru
      _
    // Predicated region
    $region14: #{tpu_custom_call.1} parent=1 // pred_check
      _
    $region15: #{tpu_custom_call.1} parent=1 // pred_check_branch
      %36 = sbr.rel (0) target = $region17
    $region16: #{tpu_custom_call.1} parent=1 // pred_region
      %37 = dma.done [#allocation3], 128
    $region17: #{tpu_custom_call.1} parent=1 // pred_fallthru
      _
    // Predicated region
    $region18: #{tpu_custom_call.1} parent=1 // pred_check
      _
    $region19: #{tpu_custom_call.1} parent=1 // pred_check_branch
      %39 = sbr.rel (0) target = $region21
    $region20: #{tpu_custom_call.1} parent=1 // pred_region
      %40 = dma.done [#allocation6], 2048
    $region21: #{tpu_custom_call.1} parent=1 // pred_fallthru
      _
    %v41 = vld [vmem:[#allocation2] sm:$0xff]
    %v42 = vld [vmem:[#allocation5] sm:$0xff]
    %v43 = vld [vmem:[#allocation5 + $0x8] sm:$0xff]
    %v44 = vld [vmem:[#allocation5 + $0x10] sm:$0xff]
    %v45 = vld [vmem:[#allocation5 + $0x18] sm:$0xff]
    %v46 = vld [vmem:[#allocation5 + $0x20] sm:$0xff]
    %v47 = vld [vmem:[#allocation5 + $0x28] sm:$0xff]
    %v48 = vld [vmem:[#allocation5 + $0x30] sm:$0xff]
    %v49 = vld [vmem:[#allocation5 + $0x38] sm:$0xff]
    %v50 = vld [vmem:[#allocation5 + $0x40] sm:$0xff]
    %v51 = vld [vmem:[#allocation5 + $0x48] sm:$0xff]
    %v52 = vld [vmem:[#allocation5 + $0x50] sm:$0xff]
    %v53 = vld [vmem:[#allocation5 + $0x58] sm:$0xff]
    %v54 = vld [vmem:[#allocation5 + $0x60] sm:$0xff]
    %v55 = vld [vmem:[#allocation5 + $0x68] sm:$0xff]
    %v56 = vld [vmem:[#allocation5 + $0x70] sm:$0xff]
    %v57 = vld [vmem:[#allocation5 + $0x78] sm:$0xff]
    %v58 = vld [vmem:[%s2] sm:$0x1]
    %v60 = vlaneseq
    %v61 = vshrl.u32 %v60, 7
    %v62 = vsub.s32 0, %v61
    %v63 = vrot.slane %v58, %v62
    %65 = vmatprep.subr.mxu0 0.0
    %66 = vmatpush1.msra.mxu0 %v42
    %67 = vmatprep.subr.mxu0 0.0
    %68 = vmatpush1.msra.mxu0 %v43
    %69 = vmatprep.subr.mxu0 0.0
    %70 = vmatpush1.msra.mxu0 %v44
    %71 = vmatprep.subr.mxu0 0.0
    %72 = vmatpush1.msra.mxu0 %v45
    %73 = vmatprep.subr.mxu0 0.0
    %74 = vmatpush1.msra.mxu0 %v46
    %75 = vmatprep.subr.mxu0 0.0
    %76 = vmatpush1.msra.mxu0 %v47
    %77 = vmatprep.subr.mxu0 0.0
    %78 = vmatpush1.msra.mxu0 %v48
    %79 = vmatprep.subr.mxu0 0.0
    %80 = vmatpush1.msra.mxu0 %v49
    %81 = vmatprep.subr.mxu0 0.0
    %82 = vmatpush1.msra.mxu0 %v50
    %83 = vmatprep.subr.mxu0 0.0
    %84 = vmatpush1.msra.mxu0 %v51
    %85 = vmatprep.subr.mxu0 0.0
    %86 = vmatpush1.msra.mxu0 %v52
    %87 = vmatprep.subr.mxu0 0.0
    %88 = vmatpush1.msra.mxu0 %v53
    %89 = vmatprep.subr.mxu0 0.0
    %90 = vmatpush1.msra.mxu0 %v54
    %91 = vmatprep.subr.mxu0 0.0
    %92 = vmatpush1.msra.mxu0 %v55
    %93 = vmatprep.subr.mxu0 0.0
    %94 = vmatpush1.msra.mxu0 %v56
    %95 = vmatprep.subr.mxu0 0.0
    %96 = vmatpush1.msra.mxu0 %v57
    %97 = vmatprep.subr.mxu0 0.0
    %98 = vmatpush1.msra.mxu0 0.0
    %99 = vmatprep.subr.mxu0 0.0
    %100 = vmatpush1.msra.mxu0 0.0
    %101 = vmatprep.subr.mxu0 0.0
    %102 = vmatpush1.msra.mxu0 0.0
    %103 = vmatprep.subr.mxu0 0.0
    %104 = vmatpush1.msra.mxu0 0.0
    %105 = vmatprep.subr.mxu0 0.0
    %106 = vmatpush1.msra.mxu0 0.0
    %107 = vmatprep.subr.mxu0 0.0
    %108 = vmatpush1.msra.mxu0 0.0
    %109 = vmatprep.subr.mxu0 0.0
    %110 = vmatpush1.msra.mxu0 0.0
    %111 = vmatprep.subr.mxu0 0.0
    %112 = vmatpush1.msra.mxu0 0.0
    %113 = vmatprep.subr.mxu0 0.0
    %114 = vmatpush1.msra.mxu0 0.0
    %115 = vmatprep.subr.mxu0 0.0
    %116 = vmatpush1.msra.mxu0 0.0
    %117 = vmatprep.subr.mxu0 0.0
    %118 = vmatpush1.msra.mxu0 0.0
    %119 = vmatprep.subr.mxu0 0.0
    %120 = vmatpush1.msra.mxu0 0.0
    %121 = vmatprep.subr.mxu0 0.0
    %122 = vmatpush1.msra.mxu0 0.0
    %123 = vmatprep.subr.mxu0 0.0
    %124 = vmatpush1.msra.mxu0 0.0
    %125 = vmatprep.subr.mxu0 0.0
    %126 = vmatpush1.msra.mxu0 0.0
    %127 = vmatprep.subr.mxu0 0.0
    %128 = vmatpush1.msra.mxu0 0.0
    %129 = vmatprep.mubr.f32.mxu0 0.0
    %130 = vmatmul.mubr.f32.gmra.mrb[0].mxu0 %v41
    %v131 = vpop.f32.mrb[0].mxu0
    %v132 = vadd.f32 %v63, %v131
    %v133 = vpop.f32.mrb[0].mxu0
    %134 = vdwg.mxu0
    %135 = vst [vmem:[#allocation7] sm:$0xff] %v132
    // Predicated region
    $region22: #{tpu_custom_call.1} parent=1 // pred_check
      _
    $region23: #{tpu_custom_call.1} parent=1 // pred_check_branch
      %137 = sbr.rel (0) target = $region25
    $region24: #{tpu_custom_call.1} parent=1 // pred_region
      %s139 = ssub.s32 128, 128
      %140 = vsyncadd [#allocation4], %s139
      %s142 = sshll.u32 [#allocation7], 4
      %s143 = int_to_ptr.vmem [resolvable:$true] %s142
      %145 = dma.vmem_to_hbm [thread:$0]  %s143, 128, %s3, [#allocation4]
    $region25: #{tpu_custom_call.1} parent=1 // pred_fallthru
      _
    // Predicated region
    $region26: #{tpu_custom_call.1} parent=1 // pred_check
      _
    $region27: #{tpu_custom_call.1} parent=1 // pred_check_branch
      %147 = sbr.rel (0) target = $region29
    $region28: #{tpu_custom_call.1} parent=1 // pred_region
      %148 = dma.done [#allocation4], 128
    $region29: #{tpu_custom_call.1} parent=1 // pred_fallthru
      _
    %149 = vsyncpa [#allocation3], 1
    %150 = vsyncpa [#allocation6], 1
    %151 = vsyncpa [#allocation4], 1

</llo_original>
